<compile_context>
chip_gen: v7x
topology: tpu7x:2x2x1
jax: 0.10.0
libtpu: 0.0.40
codegen_flags: <defaults>
</compile_context>

<pallas_src>
import jax
import jax.numpy as jnp
from jax.experimental import pallas as pl
from jax.experimental.pallas import tpu as pltpu

_LANES = 512              # lane-dense last dim (multiple of 128)
_MAX_TILE_ROWS = 512      # 512*512*4B = 1 MiB per buffer -> ~4 MiB double-buffered in+out
_SMALL_BYTES = 256 * 1024 # below this, XLA's fused elementwise beats kernel launch overhead


def _scale2_kernel(x_ref, o_ref):
    # Elementwise hot path: o = 2 * x on the current VMEM tile (1 VPU op/elem).
    o_ref[...] = x_ref[...] * 2.0


def _round_up(n, m):
    return ((n + m - 1) // m) * m


def nnmodule0_forward(x, *, force_pallas=False):
    """Pallas implementation of NNModule0.forward: returns 2 * x.

    Accepts any shape/float dtype; shape and dtype are preserved.
    """
    orig_shape = x.shape
    orig_dtype = x.dtype
    total = int(x.size)
    itemsize = jnp.dtype(orig_dtype).itemsize

    # Tiny inputs: per-pallas_call fixed overhead dwarfs the work -> let XLA fuse it.
    if not force_pallas and total * itemsize < _SMALL_BYTES:
        return (2.0 * x).astype(orig_dtype)

    # Lane-dense layout: flatten -> pad to a whole number of (tile_rows, 512)
    # tiles -> 2D view whose last dim is a large multiple of 128.
    flat = x.reshape(-1)
    rows = pl.cdiv(total, _LANES)
    tile_rows = min(_MAX_TILE_ROWS, _round_up(rows, 8))   # sublane-aligned tile height
    rows_padded = _round_up(rows, tile_rows)
    padded_total = rows_padded * _LANES
    if padded_total != total:
        flat = jnp.pad(flat, (0, padded_total - total))
    x2d = flat.reshape(rows_padded, _LANES)

    grid = (rows_padded // tile_rows,)

    out2d = pl.pallas_call(
        _scale2_kernel,
        out_shape=jax.ShapeDtypeStruct((rows_padded, _LANES), orig_dtype),
        grid_spec=pl.GridSpec(
            grid=grid,
            in_specs=[pl.BlockSpec((tile_rows, _LANES), lambda i: (i, 0))],
            out_specs=pl.BlockSpec((tile_rows, _LANES), lambda i: (i, 0)),
        ),
        compiler_params=pltpu.CompilerParams(
            # Independent tiles: lets the 2 TensorCores on v7x split the grid.
            dimension_semantics=("parallel",),
        ),
        cost_estimate=pl.CostEstimate(
            flops=total,
            transcendentals=0,
            bytes_accessed=2 * total * itemsize,
        ),
    )(x2d)

    return out2d.reshape(-1)[:total].reshape(orig_shape)


if __name__ == "__main__":
    key = jax.random.PRNGKey(0)
    x = jax.random.normal(key, (2, 4, 16, 16), dtype=jnp.float32)
    ref = 2.0 * x

    # Pallas path (forced so the TPU kernel actually compiles and runs here).
    y_pallas = nnmodule0_forward(x, force_pallas=True)
    jax.block_until_ready(y_pallas)
    assert y_pallas.shape == x.shape and y_pallas.dtype == x.dtype
    assert jnp.array_equal(y_pallas, ref), "pallas path mismatch vs 2*x"

    # Default path: KB-scale input short-circuits to XLA; semantics identical.
    y_default = nnmodule0_forward(x)
    jax.block_until_ready(y_default)
    assert y_default.shape == x.shape and y_default.dtype == x.dtype
    assert jnp.array_equal(y_default, ref), "default path mismatch vs 2*x"

    print("KERNEL_OK")
</pallas_src>

<mosaic_0001>
module attributes {stable_mosaic.version = 11 : i64} {
  func.func @_scale2_kernel(%arg0: i32, %arg1: memref<8x512xf32, #tpu.memory_space<vmem>>, %arg2: memref<8x512xf32, #tpu.memory_space<vmem>>) attributes {dimension_semantics = [#tpu.dimension_semantics<parallel>], iteration_bounds = array<i64: 1>, scalar_prefetch = 0 : i64, scratch_operands = 0 : i64, tpu.core_type = #tpu.core_type<tc>, window_params = [{transform_indices = @transform_0, window_bounds = array<i64: 8, 512>}, {transform_indices = @transform_1, window_bounds = array<i64: 8, 512>}]} {
    %c0 = arith.constant 0 : index
    %c0_0 = arith.constant 0 : index
    %0 = vector.load %arg1[%c0, %c0_0] : memref<8x512xf32, #tpu.memory_space<vmem>>, vector<8x512xf32>
    %cst = arith.constant 2.000000e+00 : f32
    %1 = vector.broadcast %cst : f32 to vector<8x512xf32>
    %2 = arith.mulf %0, %1 : vector<8x512xf32>
    %c0_1 = arith.constant 0 : index
    %c0_2 = arith.constant 0 : index
    %3 = vector.load %arg2[%c0_1, %c0_2] : memref<8x512xf32, #tpu.memory_space<vmem>>, vector<8x512xf32>
    tpu.vector_store %arg2[%c0_1, %c0_2], %2 {strides = array<i32>} : memref<8x512xf32, #tpu.memory_space<vmem>>, vector<8x512xf32>,
    return
  }
  func.func @transform_0(%arg0: i32) -> (i32, i32) {
    %c0_i32 = arith.constant 0 : i32
    %c0_i32_0 = arith.constant 0 : i32
    return %arg0, %c0_i32 : i32, i32
  }
  func.func @transform_1(%arg0: i32) -> (i32, i32) {
    %c0_i32 = arith.constant 0 : i32
    %c0_i32_0 = arith.constant 0 : i32
    return %arg0, %c0_i32 : i32, i32
  }
}

</mosaic_0001>

<llo_original>
// kernel: tpu_custom_call.1
$region0: #{tpu_custom_call.1}
  #allocation0 [shape = 'u32[]', space=smem, size = 0x4, offset = 0x4, fixed_abs, tag = 'smem constant byte address 0x4 - core index']
  #allocation1 [shape = 'u32[144,128]{1,0:T(1,128)}', space=vmem, size = 0x12000, scoped, tag = 'internal scratch']
  %s0 = inlined_call_operand.hbm [shape: f32[8,512], index: 0, kind: input, shape index: {}]
  %s1 = inlined_call_operand.hbm [shape: f32[8,512], index: 1, kind: output, shape index: {}]
  %s2 = sld [smem:[#allocation0]]
  $region18: #{tpu_custom_call.1} parent=0
    _
  %s4 = ssub.s32 1, %s2
  %s5 = scalar_select 0, %s4, %s2
  $region1: #{tpu_custom_call.1} parent=0
    #allocation2 [shape = 'u8[16384]{0}', space=vmem, size = 0x4000, scoped, tag = 'input window, operand 0, single buffered']
    #allocation3 [shape = 's32[1]{0}', space=sflag, size = 0x4, scoped, tag = 'scoped memory for tpu_custom_call.1']
    #allocation4 [shape = 's32[1]{0}', space=sflag, size = 0x4, scoped, tag = 'scoped memory for tpu_custom_call.1']
    #allocation5 [shape = 'u8[16384]{0}', space=vmem, size = 0x4000, scoped, tag = 'output window, operand 0, single buffered']
    %6 = vsyncpa [#allocation3], 0
    %7 = vsyncpa [#allocation4], 0
    // Predicated region
    $region2: #{tpu_custom_call.1} parent=1 // pred_check
      _
    $region3: #{tpu_custom_call.1} parent=1 // pred_check_branch
      %9 = sbr.rel (0) target = $region5
    $region4: #{tpu_custom_call.1} parent=1 // pred_region
      %s11 = ssub.s32 512, 512
      %12 = vsyncadd [#allocation3], %s11
      %s14 = sshll.u32 [#allocation2], 4
      %s15 = int_to_ptr.vmem [resolvable:$true] %s14
      %17 = dma.hbm_to_vmem [thread:$0]  %s0, 512, %s15, [#allocation3]
    $region5: #{tpu_custom_call.1} parent=1 // pred_fallthru
      _
    // Predicated region
    $region6: #{tpu_custom_call.1} parent=1 // pred_check
      _
    $region7: #{tpu_custom_call.1} parent=1 // pred_check_branch
      %19 = sbr.rel (0) target = $region9
    $region8: #{tpu_custom_call.1} parent=1 // pred_region
      %20 = dma.done [#allocation3], 512
    $region9: #{tpu_custom_call.1} parent=1 // pred_fallthru
      _
    %v21 = vld [vmem:[#allocation2] sm:$0xff]
    %v22 = vld [vmem:[#allocation2 + $0x8] sm:$0xff]
    %v23 = vld [vmem:[#allocation2 + $0x10] sm:$0xff]
    %v24 = vld [vmem:[#allocation2 + $0x18] sm:$0xff]
    %v25 = vmul.f32 %v21, 2.0
    %v26 = vmul.f32 %v22, 2.0
    %v27 = vmul.f32 %v23, 2.0
    %v28 = vmul.f32 %v24, 2.0
    %29 = vst [vmem:[#allocation5] sm:$0xff] %v25
    %30 = vst [vmem:[#allocation5 + $0x8] sm:$0xff] %v26
    %31 = vst [vmem:[#allocation5 + $0x10] sm:$0xff] %v27
    %32 = vst [vmem:[#allocation5 + $0x18] sm:$0xff] %v28
    // Predicated region
    $region10: #{tpu_custom_call.1} parent=1 // pred_check
      _
    $region11: #{tpu_custom_call.1} parent=1 // pred_check_branch
      %34 = sbr.rel (0) target = $region13
    $region12: #{tpu_custom_call.1} parent=1 // pred_region
      %s36 = ssub.s32 512, 512
      %37 = vsyncadd [#allocation4], %s36
      %s39 = sshll.u32 [#allocation5], 4
      %s40 = int_to_ptr.vmem [resolvable:$true] %s39
      %42 = dma.vmem_to_hbm [thread:$0]  %s40, 512, %s1, [#allocation4]
    $region13: #{tpu_custom_call.1} parent=1 // pred_fallthru
      _
    // Predicated region
    $region14: #{tpu_custom_call.1} parent=1 // pred_check
      _
    $region15: #{tpu_custom_call.1} parent=1 // pred_check_branch
      %44 = sbr.rel (0) target = $region17
    $region16: #{tpu_custom_call.1} parent=1 // pred_region
      %45 = dma.done [#allocation4], 512
    $region17: #{tpu_custom_call.1} parent=1 // pred_fallthru
      _
    %46 = vsyncpa [#allocation3], 1
    %47 = vsyncpa [#allocation4], 1

</llo_original>
